<compile_context>
chip_gen: v7x
topology: tpu7x:2x2x1
jax: 0.10.0
libtpu: 0.0.40
codegen_flags: <defaults>
</compile_context>

<pallas_src>
import functools

import jax
import jax.numpy as jnp
from jax.experimental import pallas as pl
from jax.experimental.pallas import tpu as pltpu


def _round_up(x, m):
    return (x + m - 1) // m * m


def _iaf_fused_kernel(z_ref, h_ref, whz_ref, whh_ref, bh_ref, wo_ref, bo_ref,
                      out_ref, *, d):
    dp = z_ref.shape[1]                       # padded feature width (mult of 128)

    z = z_ref[...]                            # [TB, DP] bf16 (zero past lane d)
    h = h_ref[...]                            # [TB, C]  bf16

    # Fused hidden layer for both (m, s) nets: bf16 MXU, f32 accumulate.
    hid = (jnp.dot(z, whz_ref[...], preferred_element_type=jnp.float32)
           + jnp.dot(h, whh_ref[...], preferred_element_type=jnp.float32)
           + bh_ref[...])
    hid = jnp.maximum(hid, 0.0)

    # Fused (block-diagonal) output layer: [TB, 2HP] @ [2HP, 2DP].
    out = jnp.dot(hid.astype(jnp.bfloat16), wo_ref[...],
                  preferred_element_type=jnp.float32) + bo_ref[...]
    m = out[:, :dp]                           # 128-aligned static views
    s = out[:, dp:] + 1.5

    sigma = jax.nn.sigmoid(s)
    zf = z.astype(jnp.float32)
    z_new = sigma * zf + (1.0 - sigma) * m    # padded lanes stay exactly 0

    # Per-row loss partial over the d valid lanes, parked in spare lane `d` of
    # the same lane-dense output slab (single unmasked wide store).
    lane = jax.lax.broadcasted_iota(jnp.int32, s.shape, 1)
    logterm = jnp.where(lane < d, jnp.log(sigma + 1e-6), 0.0)
    nls = -jnp.sum(logterm, axis=1, keepdims=True)          # [TB, 1]
    out_ref[...] = jnp.where(lane == d, nls, z_new)


def pack_iaf_params(m_params, s_params):
    """One-time fusion/padding of the two ARNNs into one wide, lane-aligned MLP."""
    D, H = m_params["w1"].shape
    C = m_params["wc"].shape[0]
    DP = _round_up(D + 1, 128)     # +1 spare lane carries the per-row loss
    HP = _round_up(H, 64)          # 2*HP is a multiple of 128

    def place_h(wm, ws):           # [K, H] x2 -> [K, 2*HP]
        k = wm.shape[0]
        o = jnp.zeros((k, 2 * HP), jnp.float32)
        o = o.at[:, :H].set(wm)
        o = o.at[:, HP:HP + H].set(ws)
        return o

    whz = jnp.zeros((DP, 2 * HP), jnp.float32)
    whz = whz.at[:D].set(place_h(m_params["w1"], s_params["w1"]))
    whh = place_h(m_params["wc"], s_params["wc"])
    bh = place_h(m_params["b1"], s_params["b1"])               # [1, 2*HP]

    wo = jnp.zeros((2 * HP, 2 * DP), jnp.float32)
    wo = wo.at[:H, :D].set(m_params["w2"])
    wo = wo.at[HP:HP + H, DP:DP + D].set(s_params["w2"])
    bo = jnp.zeros((1, 2 * DP), jnp.float32)
    bo = bo.at[:, :D].set(m_params["b2"])
    bo = bo.at[:, DP:DP + D].set(s_params["b2"])

    return {
        "whz": whz.astype(jnp.bfloat16), "whh": whh.astype(jnp.bfloat16),
        "bh": bh, "wo": wo.astype(jnp.bfloat16), "bo": bo,
        "d": D, "c": C, "dp": DP, "hp": HP,
    }


def iaf_step(z, h, packed, *, block_b=None):
    """z: [B, D], h: [B, C]; packed: output of pack_iaf_params.

    Returns (z_out [B, D] f32, l scalar) matching the PyTorch IAFStep forward.
    """
    B, D = z.shape
    C = h.shape[1]
    DP, HP = packed["dp"], packed["hp"]

    # Batch tile: large (amortizes ~0.35us/grid-step overhead; ~0.8 KiB/row of
    # VMEM incl. double-buffering at these widths), split into >=2 blocks when
    # B allows so the "parallel" axis can shard across v7x's two TensorCores.
    if block_b is None:
        block_b = 4096
        if B >= 32:
            block_b = min(block_b, _round_up(pl.cdiv(B, 2), 16))
    block_b = max(16, _round_up(min(block_b, _round_up(B, 16)), 16))
    b_pad = _round_up(B, block_b)
    nb = b_pad // block_b

    # Lane-pad z to DP and cast MXU operands to bf16 (accumulation stays f32).
    z_p = jnp.pad(z.astype(jnp.bfloat16), ((0, b_pad - B), (0, DP - D)))
    h_p = jnp.pad(h.astype(jnp.bfloat16), ((0, b_pad - B), (0, 0)))

    const = lambda i: (0, 0)      # weights/biases stay VMEM-resident
    batch = lambda i: (i, 0)      # z/h/out pipelined over the batch

    slab = pl.pallas_call(
        functools.partial(_iaf_fused_kernel, d=D),
        out_shape=jax.ShapeDtypeStruct((b_pad, DP), jnp.float32),
        grid=(nb,),
        in_specs=[
            pl.BlockSpec((block_b, DP), batch),
            pl.BlockSpec((block_b, C), batch),
            pl.BlockSpec((DP, 2 * HP), const),
            pl.BlockSpec((C, 2 * HP), const),
            pl.BlockSpec((1, 2 * HP), const),
            pl.BlockSpec((2 * HP, 2 * DP), const),
            pl.BlockSpec((1, 2 * DP), const),
        ],
        out_specs=pl.BlockSpec((block_b, DP), batch),
        compiler_params=pltpu.CompilerParams(
            dimension_semantics=("parallel",),       # batch blocks independent
            vmem_limit_bytes=32 * 1024 * 1024,       # safe on v5e/v6e/v7x
        ),
    )(z_p, h_p, packed["whz"], packed["whh"], packed["bh"],
      packed["wo"], packed["bo"])

    z_out = slab[:B, :D]
    l = jnp.sum(slab[:B, D])        # per-row partials from spare lane D
    return z_out, l


def _made_masks(in_features, hidden_features):
    """Standard MADE degrees/masks for a one-hidden-layer autoregressive net."""
    deg_in = jnp.arange(1, in_features + 1)
    deg_h = (jnp.arange(hidden_features) % max(in_features - 1, 1)) + 1
    deg_out = jnp.arange(1, in_features + 1)
    mask1 = (deg_h[None, :] >= deg_in[:, None]).astype(jnp.float32)   # [D, H]
    mask2 = (deg_out[None, :] > deg_h[:, None]).astype(jnp.float32)   # [H, D]
    return mask1, mask2


def _init_arnn_params(key, in_features, hidden_features, context_features):
    mask1, mask2 = _made_masks(in_features, hidden_features)
    k1, k2, k3, k4, k5 = jax.random.split(key, 5)
    s1 = 1.0 / jnp.sqrt(in_features)
    sc = 1.0 / jnp.sqrt(context_features)
    s2 = 1.0 / jnp.sqrt(hidden_features)
    w1 = jax.random.normal(k1, (in_features, hidden_features), jnp.float32) * s1
    wc = jax.random.normal(k2, (context_features, hidden_features), jnp.float32) * sc
    w2 = jax.random.normal(k3, (hidden_features, in_features), jnp.float32) * s2
    b1 = jax.random.normal(k4, (1, hidden_features), jnp.float32) * 0.01
    b2 = jax.random.normal(k5, (1, in_features), jnp.float32) * 0.01
    return {"w1": w1 * mask1, "b1": b1, "wc": wc, "w2": w2 * mask2, "b2": b2}


def iaf_step_reference(z, h, m_params, s_params):
    """Pure-JAX f32 reference (unfused) for correctness checking."""
    def arnn(p):
        hid = jnp.maximum(z @ p["w1"] + h @ p["wc"] + p["b1"], 0.0)
        return hid @ p["w2"] + p["b2"]
    m = arnn(m_params)
    s = arnn(s_params) + 1.5
    sigma = jax.nn.sigmoid(s)
    z_new = sigma * z + (1.0 - sigma) * m
    l = -jnp.sum(jnp.log(sigma + 1e-6))
    return z_new, l


if __name__ == "__main__":
    # Small shapes consistent with the module.
    B, D, H, C = 4, 8, 32, 16   # batch, in_features, hidden_features, context

    key = jax.random.PRNGKey(0)
    kz, kh, km, ks = jax.random.split(key, 4)
    z = jax.random.normal(kz, (B, D), jnp.float32)
    h = jax.random.normal(kh, (B, C), jnp.float32)

    m_params = _init_arnn_params(km, D, H, C)
    s_params = _init_arnn_params(ks, D, H, C)

    packed = pack_iaf_params(m_params, s_params)   # one-time param transform
    z_out, l = iaf_step(z, h, packed)
    jax.block_until_ready((z_out, l))

    # Check against the pure-f32 reference (tolerances loosened for bf16 MXU).
    z_ref, l_ref = iaf_step_reference(z, h, m_params, s_params)
    assert z_out.shape == (B, D)
    assert jnp.allclose(z_out, z_ref, atol=5e-2, rtol=5e-2), "z mismatch"
    assert jnp.allclose(l, l_ref, atol=2e-1, rtol=5e-2), "l mismatch"

    print("KERNEL_OK")
</pallas_src>

<mosaic_0001>
module attributes {stable_mosaic.version = 11 : i64} {
  func.func @_iaf_fused_kernel(%arg0: i32, %arg1: memref<16x128xbf16, #tpu.memory_space<vmem>>, %arg2: memref<16x16xbf16, #tpu.memory_space<vmem>>, %arg3: memref<128x128xbf16, #tpu.memory_space<vmem>>, %arg4: memref<16x128xbf16, #tpu.memory_space<vmem>>, %arg5: memref<1x128xf32, #tpu.memory_space<vmem>>, %arg6: memref<128x256xbf16, #tpu.memory_space<vmem>>, %arg7: memref<1x256xf32, #tpu.memory_space<vmem>>, %arg8: memref<16x128xf32, #tpu.memory_space<vmem>>) attributes {dimension_semantics = [#tpu.dimension_semantics<parallel>], iteration_bounds = array<i64: 1>, scalar_prefetch = 0 : i64, scratch_operands = 0 : i64, tpu.core_type = #tpu.core_type<tc>, window_params = [{transform_indices = @transform_0, window_bounds = array<i64: 16, 128>}, {transform_indices = @transform_1, window_bounds = array<i64: 16, 16>}, {pipeline_mode = #tpu.pipeline_mode<synchronous>, transform_indices = @transform_2, window_bounds = array<i64: 128, 128>}, {pipeline_mode = #tpu.pipeline_mode<synchronous>, transform_indices = @transform_3, window_bounds = array<i64: 16, 128>}, {pipeline_mode = #tpu.pipeline_mode<synchronous>, transform_indices = @transform_4, window_bounds = array<i64: 1, 128>}, {pipeline_mode = #tpu.pipeline_mode<synchronous>, transform_indices = @transform_5, window_bounds = array<i64: 128, 256>}, {pipeline_mode = #tpu.pipeline_mode<synchronous>, transform_indices = @transform_6, window_bounds = array<i64: 1, 256>}, {transform_indices = @transform_7, window_bounds = array<i64: 16, 128>}]} {
    %c0 = arith.constant 0 : index
    %c0_0 = arith.constant 0 : index
    %0 = vector.load %arg1[%c0, %c0_0] : memref<16x128xbf16, #tpu.memory_space<vmem>>, vector<16x128xbf16>
    %c0_1 = arith.constant 0 : index
    %c0_2 = arith.constant 0 : index
    %1 = vector.load %arg2[%c0_1, %c0_2] : memref<16x16xbf16, #tpu.memory_space<vmem>>, vector<16x16xbf16>
    %c0_3 = arith.constant 0 : index
    %c0_4 = arith.constant 0 : index
    %2 = vector.load %arg3[%c0_3, %c0_4] : memref<128x128xbf16, #tpu.memory_space<vmem>>, vector<128x128xbf16>
    %cst = arith.constant dense<0.000000e+00> : vector<16x128xf32>
    %3 = tpu.matmul %0, %2, %cst {dimension_numbers = #tpu.dot_dimension_numbers<[1], [0], [0], [1], [0, 0, 1, 1], [], []>} : vector<16x128xbf16>, vector<128x128xbf16>, vector<16x128xf32> -> vector<16x128xf32>
    %c0_5 = arith.constant 0 : index
    %c0_6 = arith.constant 0 : index
    %4 = vector.load %arg4[%c0_5, %c0_6] : memref<16x128xbf16, #tpu.memory_space<vmem>>, vector<16x128xbf16>
    %cst_7 = arith.constant dense<0.000000e+00> : vector<16x128xf32>
    %5 = tpu.matmul %1, %4, %cst_7 {dimension_numbers = #tpu.dot_dimension_numbers<[1], [0], [0], [1], [0, 0, 1, 1], [], []>} : vector<16x16xbf16>, vector<16x128xbf16>, vector<16x128xf32> -> vector<16x128xf32>
    %6 = arith.addf %3, %5 : vector<16x128xf32>
    %c0_8 = arith.constant 0 : index
    %c0_9 = arith.constant 0 : index
    %7 = vector.load %arg5[%c0_8, %c0_9] : memref<1x128xf32, #tpu.memory_space<vmem>>, vector<1x128xf32>
    %8 = vector.broadcast %7 : vector<1x128xf32> to vector<16x128xf32>
    %9 = arith.addf %6, %8 : vector<16x128xf32>
    %cst_10 = arith.constant 0.000000e+00 : f32
    %10 = vector.broadcast %cst_10 : f32 to vector<16x128xf32>
    %11 = arith.maximumf %9, %10 : vector<16x128xf32>
    %12 = arith.truncf %11 : vector<16x128xf32> to vector<16x128xbf16>
    %c0_11 = arith.constant 0 : index
    %c0_12 = arith.constant 0 : index
    %13 = vector.load %arg6[%c0_11, %c0_12] : memref<128x256xbf16, #tpu.memory_space<vmem>>, vector<128x256xbf16>
    %cst_13 = arith.constant dense<0.000000e+00> : vector<16x256xf32>
    %14 = tpu.matmul %12, %13, %cst_13 {dimension_numbers = #tpu.dot_dimension_numbers<[1], [0], [0], [1], [0, 0, 1, 1], [], []>} : vector<16x128xbf16>, vector<128x256xbf16>, vector<16x256xf32> -> vector<16x256xf32>
    %c0_14 = arith.constant 0 : index
    %c0_15 = arith.constant 0 : index
    %15 = vector.load %arg7[%c0_14, %c0_15] : memref<1x256xf32, #tpu.memory_space<vmem>>, vector<1x256xf32>
    %16 = vector.broadcast %15 : vector<1x256xf32> to vector<16x256xf32>
    %17 = arith.addf %14, %16 : vector<16x256xf32>
    %18 = vector.extract_strided_slice %17 {offsets = [0, 0], sizes = [16, 128], strides = [1, 1]} : vector<16x256xf32> to vector<16x128xf32>
    %19 = vector.extract_strided_slice %17 {offsets = [0, 128], sizes = [16, 128], strides = [1, 1]} : vector<16x256xf32> to vector<16x128xf32>
    %cst_16 = arith.constant 1.500000e+00 : f32
    %20 = vector.broadcast %cst_16 : f32 to vector<16x128xf32>
    %21 = arith.addf %19, %20 : vector<16x128xf32>
    %22 = arith.negf %21 : vector<16x128xf32>
    %23 = math.exp %22 : vector<16x128xf32>
    %cst_17 = arith.constant 1.000000e+00 : f32
    %24 = vector.broadcast %cst_17 : f32 to vector<16x128xf32>
    %25 = arith.addf %24, %23 : vector<16x128xf32>
    %26 = arith.divf %24, %25 : vector<16x128xf32>
    %27 = arith.extf %0 : vector<16x128xbf16> to vector<16x128xf32>
    %28 = arith.mulf %26, %27 : vector<16x128xf32>
    %cst_18 = arith.constant 1.000000e+00 : f32
    %29 = vector.broadcast %cst_18 : f32 to vector<16x128xf32>
    %30 = arith.subf %29, %26 : vector<16x128xf32>
    %31 = arith.mulf %30, %18 : vector<16x128xf32>
    %32 = arith.addf %28, %31 : vector<16x128xf32>
    %33 = tpu.iota {dimensions = array<i32: 1>} : vector<16x128xi32>
    %c8_i32 = arith.constant 8 : i32
    %34 = vector.broadcast %c8_i32 : i32 to vector<16x128xi32>
    %35 = arith.cmpi slt, %33, %34 : vector<16x128xi32>
    %cst_19 = arith.constant 9.99999997E-7 : f32
    %36 = vector.broadcast %cst_19 : f32 to vector<16x128xf32>
    %37 = arith.addf %26, %36 : vector<16x128xf32>
    %38 = math.log %37 : vector<16x128xf32>
    %cst_20 = arith.constant 0.000000e+00 : f32
    %39 = vector.broadcast %cst_20 : f32 to vector<16x128xf32>
    %40 = arith.select %35, %38, %39 : vector<16x128xi1>, vector<16x128xf32>
    %cst_21 = arith.constant dense<0.000000e+00> : vector<16xf32>
    %41 = vector.multi_reduction <add>, %40, %cst_21 [1] : vector<16x128xf32> to vector<16xf32>
    %42 = vector.shape_cast %41 : vector<16xf32> to vector<16x1xf32>
    %cst_22 = arith.constant 0.000000e+00 : f32
    %43 = vector.broadcast %cst_22 : f32 to vector<16x1xf32>
    %44 = arith.subf %43, %42 : vector<16x1xf32>
    %c8_i32_23 = arith.constant 8 : i32
    %45 = vector.broadcast %c8_i32_23 : i32 to vector<16x128xi32>
    %46 = arith.cmpi eq, %33, %45 : vector<16x128xi32>
    %47 = vector.shape_cast %44 : vector<16x1xf32> to vector<16x1xf32>
    %48 = vector.broadcast %47 : vector<16x1xf32> to vector<16x128xf32>
    %49 = arith.select %46, %48, %32 : vector<16x128xi1>, vector<16x128xf32>
    %c0_24 = arith.constant 0 : index
    %c0_25 = arith.constant 0 : index
    %50 = vector.load %arg8[%c0_24, %c0_25] : memref<16x128xf32, #tpu.memory_space<vmem>>, vector<16x128xf32>
    tpu.vector_store %arg8[%c0_24, %c0_25], %49 {strides = array<i32>} : memref<16x128xf32, #tpu.memory_space<vmem>>, vector<16x128xf32>,
    return
  }
  func.func @transform_0(%arg0: i32) -> (i32, i32) {
    %c0_i32 = arith.constant 0 : i32
    %c0_i32_0 = arith.constant 0 : i32
    return %arg0, %c0_i32 : i32, i32
  }
  func.func @transform_1(%arg0: i32) -> (i32, i32) {
    %c0_i32 = arith.constant 0 : i32
    %c0_i32_0 = arith.constant 0 : i32
    return %arg0, %c0_i32 : i32, i32
  }
  func.func @transform_2(%arg0: i32) -> (i32, i32) {
    %c0_i32 = arith.constant 0 : i32
    %c0_i32_0 = arith.constant 0 : i32
    %c0_i32_1 = arith.constant 0 : i32
    return %c0_i32, %c0_i32_0 : i32, i32
  }
  func.func @transform_3(%arg0: i32) -> (i32, i32) {
    %c0_i32 = arith.constant 0 : i32
    %c0_i32_0 = arith.constant 0 : i32
    %c0_i32_1 = arith.constant 0 : i32
    return %c0_i32, %c0_i32_0 : i32, i32
  }
  func.func @transform_4(%arg0: i32) -> (i32, i32) {
    %c0_i32 = arith.constant 0 : i32
    %c0_i32_0 = arith.constant 0 : i32
    %c0_i32_1 = arith.constant 0 : i32
    return %c0_i32, %c0_i32_0 : i32, i32
  }
  func.func @transform_5(%arg0: i32) -> (i32, i32) {
    %c0_i32 = arith.constant 0 : i32
    %c0_i32_0 = arith.constant 0 : i32
    %c0_i32_1 = arith.constant 0 : i32
    return %c0_i32, %c0_i32_0 : i32, i32
  }
  func.func @transform_6(%arg0: i32) -> (i32, i32) {
    %c0_i32 = arith.constant 0 : i32
    %c0_i32_0 = arith.constant 0 : i32
    %c0_i32_1 = arith.constant 0 : i32
    return %c0_i32, %c0_i32_0 : i32, i32
  }
  func.func @transform_7(%arg0: i32) -> (i32, i32) {
    %c0_i32 = arith.constant 0 : i32
    %c0_i32_0 = arith.constant 0 : i32
    return %arg0, %c0_i32 : i32, i32
  }
}

</mosaic_0001>

<llo_original>
// kernel: tpu_custom_call.1
$region0: #{tpu_custom_call.1}
  #allocation0 [shape = 'u32[]', space=smem, size = 0x4, offset = 0x4, fixed_abs, tag = 'smem constant byte address 0x4 - core index']
  #allocation1 [shape = 'u32[144,128]{1,0:T(1,128)}', space=vmem, size = 0x12000, scoped, tag = 'internal scratch']
  %s0 = inlined_call_operand.hbm [shape: bf16[16,128], index: 0, kind: input, shape index: {}]
  %s1 = inlined_call_operand.hbm [shape: bf16[16,16], index: 1, kind: input, shape index: {}]
  %s2 = inlined_call_operand.hbm [shape: bf16[128,128], index: 2, kind: input, shape index: {}]
  %s3 = inlined_call_operand.vmem [shape: bf16[16,128], index: 3, kind: input, shape index: {}]
  %s4 = inlined_call_operand.vmem [shape: f32[1,128], index: 4, kind: input, shape index: {}]
  %s5 = inlined_call_operand.hbm [shape: bf16[128,256], index: 5, kind: input, shape index: {}]
  %s6 = inlined_call_operand.vmem [shape: f32[1,256], index: 6, kind: input, shape index: {}]
  %s7 = inlined_call_operand.hbm [shape: f32[16,128], index: 7, kind: output, shape index: {}]
  %s8 = sld [smem:[#allocation0]]
  $region54: #{tpu_custom_call.1} parent=0
    _
  %s10 = ssub.s32 1, %s8
  %s11 = scalar_select 0, %s10, %s8
  $region1: #{tpu_custom_call.1} parent=0
    #allocation2 [shape = 'u8[4096]{0}', space=vmem, size = 0x1000, scoped, tag = 'input window, operand 0, single buffered']
    #allocation3 [shape = 's32[1]{0}', space=sflag, size = 0x4, scoped, tag = 'scoped memory for tpu_custom_call.1']
    #allocation4 [shape = 's32[1]{0}', space=sflag, size = 0x4, scoped, tag = 'scoped memory for tpu_custom_call.1']
    #allocation5 [shape = 'u8[4096]{0}', space=vmem, size = 0x1000, scoped, tag = 'input window, operand 1, single buffered']
    #allocation6 [shape = 's32[1]{0}', space=sflag, size = 0x4, scoped, tag = 'scoped memory for tpu_custom_call.1']
    #allocation7 [shape = 'u8[32768]{0}', space=vmem, size = 0x8000, scoped, tag = 'input window, operand 2, single buffered']
    #allocation8 [shape = 'u8[65536]{0}', space=vmem, size = 0x10000, scoped, tag = 'input window, operand 5, single buffered']
    #allocation9 [shape = 's32[1]{0}', space=sflag, size = 0x4, scoped, tag = 'scoped memory for tpu_custom_call.1']
    #allocation10 [shape = 'u8[8192]{0}', space=vmem, size = 0x2000, scoped, tag = 'output window, operand 0, single buffered']
    %12 = vsyncpa [#allocation3], 0
    %13 = vsyncpa [#allocation6], 0
    %14 = vsyncpa [#allocation9], 0
    %15 = vsyncpa [#allocation4], 0
    // Predicated region
    $region2: #{tpu_custom_call.1} parent=1 // pred_check
      _
    $region3: #{tpu_custom_call.1} parent=1 // pred_check_branch
      %17 = sbr.rel (0) target = $region5
    $region4: #{tpu_custom_call.1} parent=1 // pred_region
      %s19 = ssub.s32 128, 128
      %20 = vsyncadd [#allocation3], %s19
      %s21 = sshll.u32 [#allocation2], 4
      %s22 = int_to_ptr.vmem [resolvable:$true] %s21
      %27 = dma.hbm_to_vmem [thread:$0]  %s0, 128, %s22, [#allocation3], 64, 64, 4
    $region5: #{tpu_custom_call.1} parent=1 // pred_fallthru
      _
    // Predicated region
    $region6: #{tpu_custom_call.1} parent=1 // pred_check
      _
    $region7: #{tpu_custom_call.1} parent=1 // pred_check_branch
      %29 = sbr.rel (0) target = $region9
    $region8: #{tpu_custom_call.1} parent=1 // pred_region
      %s31 = ssub.s32 128, 128
      %32 = vsyncadd [#allocation6], %s31
      %s33 = sshll.u32 [#allocation5], 4
      %s34 = int_to_ptr.vmem [resolvable:$true] %s33
      %39 = dma.hbm_to_vmem [thread:$0]  %s1, 128, %s34, [#allocation6], 64, 64, 4
    $region9: #{tpu_custom_call.1} parent=1 // pred_fallthru
      _
    // Predicated region
    $region10: #{tpu_custom_call.1} parent=1 // pred_check
      _
    $region11: #{tpu_custom_call.1} parent=1 // pred_check_branch
      %41 = sbr.rel (0) target = $region13
    $region12: #{tpu_custom_call.1} parent=1 // pred_region
      %s43 = ssub.s32 1024, 1024
      %44 = vsyncadd [#allocation6], %s43
      %s45 = sshll.u32 [#allocation7], 4
      %s46 = int_to_ptr.vmem [resolvable:$true] %s45
      %51 = dma.hbm_to_vmem [thread:$0]  %s2, 1024, %s46, [#allocation6], 64, 64, 4
    $region13: #{tpu_custom_call.1} parent=1 // pred_fallthru
      _
    // Predicated region
    $region14: #{tpu_custom_call.1} parent=1 // pred_check
      _
    $region15: #{tpu_custom_call.1} parent=1 // pred_check_branch
      %53 = sbr.rel (0) target = $region17
    $region16: #{tpu_custom_call.1} parent=1 // pred_region
      _
    $region17: #{tpu_custom_call.1} parent=1 // pred_fallthru
      _
    // Predicated region
    $region18: #{tpu_custom_call.1} parent=1 // pred_check
      _
    $region19: #{tpu_custom_call.1} parent=1 // pred_check_branch
      %55 = sbr.rel (0) target = $region21
    $region20: #{tpu_custom_call.1} parent=1 // pred_region
      _
    $region21: #{tpu_custom_call.1} parent=1 // pred_fallthru
      _
    // Predicated region
    $region22: #{tpu_custom_call.1} parent=1 // pred_check
      _
    $region23: #{tpu_custom_call.1} parent=1 // pred_check_branch
      %57 = sbr.rel (0) target = $region25
    $region24: #{tpu_custom_call.1} parent=1 // pred_region
      %s59 = ssub.s32 2048, 2048
      %60 = vsyncadd [#allocation9], %s59
      %s61 = sshll.u32 [#allocation8], 4
      %s62 = int_to_ptr.vmem [resolvable:$true] %s61
      %67 = dma.hbm_to_vmem [thread:$0]  %s5, 2048, %s62, [#allocation9], 128, 128, 8
    $region25: #{tpu_custom_call.1} parent=1 // pred_fallthru
      _
    // Predicated region
    $region26: #{tpu_custom_call.1} parent=1 // pred_check
      _
    $region27: #{tpu_custom_call.1} parent=1 // pred_check_branch
      %69 = sbr.rel (0) target = $region29
    $region28: #{tpu_custom_call.1} parent=1 // pred_region
      _
    $region29: #{tpu_custom_call.1} parent=1 // pred_fallthru
      _
    // Predicated region
    $region30: #{tpu_custom_call.1} parent=1 // pred_check
      _
    $region31: #{tpu_custom_call.1} parent=1 // pred_check_branch
      %71 = sbr.rel (0) target = $region33
    $region32: #{tpu_custom_call.1} parent=1 // pred_region
      %72 = dma.done [#allocation3], 128
    $region33: #{tpu_custom_call.1} parent=1 // pred_fallthru
      _
    // Predicated region
    $region34: #{tpu_custom_call.1} parent=1 // pred_check
      _
    $region35: #{tpu_custom_call.1} parent=1 // pred_check_branch
      %74 = sbr.rel (0) target = $region37
    $region36: #{tpu_custom_call.1} parent=1 // pred_region
      %75 = dma.done [#allocation6], 128
    $region37: #{tpu_custom_call.1} parent=1 // pred_fallthru
      _
    // Predicated region
    $region38: #{tpu_custom_call.1} parent=1 // pred_check
      _
    $region39: #{tpu_custom_call.1} parent=1 // pred_check_branch
      %77 = sbr.rel (0) target = $region41
    $region40: #{tpu_custom_call.1} parent=1 // pred_region
      %78 = dma.done [#allocation6], 1024
    $region41: #{tpu_custom_call.1} parent=1 // pred_fallthru
      _
    // Predicated region
    $region42: #{tpu_custom_call.1} parent=1 // pred_check
      _
    $region43: #{tpu_custom_call.1} parent=1 // pred_check_branch
      %80 = sbr.rel (0) target = $region45
    $region44: #{tpu_custom_call.1} parent=1 // pred_region
      %81 = dma.done [#allocation9], 2048
    $region45: #{tpu_custom_call.1} parent=1 // pred_fallthru
      _
    %v83 = vld [vmem:[#allocation2] sm:$0xf]
    %v84 = vld [vmem:[#allocation2 + $0x4] sm:$0xf]
    %v85 = vld [vmem:[#allocation5] sm:$0xf]
    %v86 = vld [vmem:[#allocation5 + $0x4] sm:$0xf]
    %v87 = vld [vmem:[#allocation7] sm:$0xf]
    %v88 = vld [vmem:[#allocation7 + $0x4] sm:$0xf]
    %v89 = vld [vmem:[#allocation7 + $0x8] sm:$0xf]
    %v90 = vld [vmem:[#allocation7 + $0xc] sm:$0xf]
    %v91 = vld [vmem:[#allocation7 + $0x10] sm:$0xf]
    %v92 = vld [vmem:[#allocation7 + $0x14] sm:$0xf]
    %v93 = vld [vmem:[#allocation7 + $0x18] sm:$0xf]
    %v94 = vld [vmem:[#allocation7 + $0x1c] sm:$0xf]
    %v95 = vld [vmem:[#allocation7 + $0x20] sm:$0xf]
    %v96 = vld [vmem:[#allocation7 + $0x24] sm:$0xf]
    %v97 = vld [vmem:[#allocation7 + $0x28] sm:$0xf]
    %v98 = vld [vmem:[#allocation7 + $0x2c] sm:$0xf]
    %v99 = vld [vmem:[#allocation7 + $0x30] sm:$0xf]
    %v100 = vld [vmem:[#allocation7 + $0x34] sm:$0xf]
    %v101 = vld [vmem:[#allocation7 + $0x38] sm:$0xf]
    %v102 = vld [vmem:[#allocation7 + $0x3c] sm:$0xf]
    %v103 = vld [vmem:[%s3] sm:$0xf]
    %v104 = vld [vmem:[%s3 + $0x4] sm:$0xf]
    %v107 = vunpack.c.l.b16 %v85
    %v108 = vunpack.c.l.b16 %v86
    %v109 = vpack.c.b16 %v108, %v107
    %v112 = vunpack.c.l.b16 %v103
    %v113 = vunpack.c.l.b16 %v104
    %v114 = vpack.c.b16 %v113, %v112
    %vm116 = vcmask 130048
    %v118 = vsel %vm116, %v109, 0
    %120 = vmatprep.subr.bf16.mxu0 0
    %121 = vmatpush1.bf16.msra.mxu0 %v114
    %122 = vmatprep.subr.bf16.mxu0 0
    %123 = vmatpush1.bf16.msra.mxu0 0
    %124 = vmatprep.subr.bf16.mxu0 0
    %125 = vmatpush1.bf16.msra.mxu0 0
    %126 = vmatprep.subr.bf16.mxu0 0
    %127 = vmatpush1.bf16.msra.mxu0 0
    %128 = vmatprep.subr.bf16.mxu0 0
    %129 = vmatpush1.bf16.msra.mxu0 0
    %130 = vmatprep.subr.bf16.mxu0 0
    %131 = vmatpush1.bf16.msra.mxu0 0
    %132 = vmatprep.subr.bf16.mxu0 0
    %133 = vmatpush1.bf16.msra.mxu0 0
    %134 = vmatprep.subr.bf16.mxu0 0
    %135 = vmatpush1.bf16.msra.mxu0 0
    %136 = vmatprep.subr.bf16.mxu0 0
    %137 = vmatpush1.bf16.msra.mxu0 0
    %138 = vmatprep.subr.bf16.mxu0 0
    %139 = vmatpush1.bf16.msra.mxu0 0
    %140 = vmatprep.subr.bf16.mxu0 0
    %141 = vmatpush1.bf16.msra.mxu0 0
    %142 = vmatprep.subr.bf16.mxu0 0
    %143 = vmatpush1.bf16.msra.mxu0 0
    %144 = vmatprep.subr.bf16.mxu0 0
    %145 = vmatpush1.bf16.msra.mxu0 0
    %146 = vmatprep.subr.bf16.mxu0 0
    %147 = vmatpush1.bf16.msra.mxu0 0
    %148 = vmatprep.subr.bf16.mxu0 0
    %149 = vmatpush1.bf16.msra.mxu0 0
    %150 = vmatprep.subr.bf16.mxu0 0
    %151 = vmatpush1.bf16.msra.mxu0 0
    %152 = vmatprep.mubr.bf16.mxu0 0
    %153 = vmatmul.mubr.bf16.gmra.mrb[0].mxu0 %v118
    %v154 = vpop.f32.mrb[0].mxu0
    %v155 = vadd.f32 0.0, %v154
    %v156 = vpop.f32.mrb[0].mxu0
    %v157 = vpop.f32.mrb[0].mxu0
    %v158 = vadd.f32 0.0, %v157
    %v159 = vpop.f32.mrb[0].mxu0
    %160 = vdwg.mxu0
    %v163 = vunpack.c.l.b16 %v83
    %v164 = vunpack.c.l.b16 %v84
    %v165 = vpack.c.b16 %v164, %v163
    %v183 = vunpack.c.l.b16 %v87
    %v184 = vunpack.c.l.b16 %v88
    %v185 = vunpack.c.l.b16 %v89
    %v186 = vunpack.c.l.b16 %v90
    %v187 = vunpack.c.l.b16 %v91
    %v188 = vunpack.c.l.b16 %v92
    %v189 = vunpack.c.l.b16 %v93
    %v190 = vunpack.c.l.b16 %v94
    %v191 = vunpack.c.l.b16 %v95
    %v192 = vunpack.c.l.b16 %v96
    %v193 = vunpack.c.l.b16 %v97
    %v194 = vunpack.c.l.b16 %v98
    %v195 = vunpack.c.l.b16 %v99
    %v196 = vunpack.c.l.b16 %v100
    %v197 = vunpack.c.l.b16 %v101
    %v198 = vunpack.c.l.b16 %v102
    %v199 = vpack.c.b16 %v184, %v183
    %v200 = vpack.c.b16 %v186, %v185
    %v201 = vpack.c.b16 %v188, %v187
    %v202 = vpack.c.b16 %v190, %v189
    %v203 = vpack.c.b16 %v192, %v191
    %v204 = vpack.c.b16 %v194, %v193
    %v205 = vpack.c.b16 %v196, %v195
    %v206 = vpack.c.b16 %v198, %v197
    %215 = vmatprep.subr.bf16.mxu0 0
    %216 = vmatpush1.bf16.msra.mxu0 %v199
    %217 = vmatprep.subr.bf16.mxu0 0
    %218 = vmatpush1.bf16.msra.mxu0 %v200
    %219 = vmatprep.subr.bf16.mxu0 0
    %220 = vmatpush1.bf16.msra.mxu0 %v201
    %221 = vmatprep.subr.bf16.mxu0 0
    %222 = vmatpush1.bf16.msra.mxu0 %v202
    %223 = vmatprep.subr.bf16.mxu0 0
    %224 = vmatpush1.bf16.msra.mxu0 %v203
    %225 = vmatprep.subr.bf16.mxu0 0
    %226 = vmatpush1.bf16.msra.mxu0 %v204
    %227 = vmatprep.subr.bf16.mxu0 0
    %228 = vmatpush1.bf16.msra.mxu0 %v205
    %229 = vmatprep.subr.bf16.mxu0 0
    %230 = vmatpush1.bf16.msra.mxu0 %v206
    %231 = vmatprep.subr.bf16.mxu0 0
    %232 = vmatpush1.bf16.msra.mxu0 0
    %233 = vmatprep.subr.bf16.mxu0 0
    %234 = vmatpush1.bf16.msra.mxu0 0
    %235 = vmatprep.subr.bf16.mxu0 0
    %236 = vmatpush1.bf16.msra.mxu0 0
    %237 = vmatprep.subr.bf16.mxu0 0
    %238 = vmatpush1.bf16.msra.mxu0 0
    %239 = vmatprep.subr.bf16.mxu0 0
    %240 = vmatpush1.bf16.msra.mxu0 0
    %241 = vmatprep.subr.bf16.mxu0 0
    %242 = vmatpush1.bf16.msra.mxu0 0
    %243 = vmatprep.subr.bf16.mxu0 0
    %244 = vmatpush1.bf16.msra.mxu0 0
    %245 = vmatprep.subr.bf16.mxu0 0
    %246 = vmatpush1.bf16.msra.mxu0 0
    %247 = vmatprep.mubr.bf16.mxu0 0
    %248 = vmatmul.mubr.bf16.gmra.mrb[0].mxu0 %v165
    %v249 = vpop.f32.mrb[0].mxu0
    %v250 = vadd.f32 %v155, %v249
    %v251 = vpop.f32.mrb[0].mxu0
    %v252 = vpop.f32.mrb[0].mxu0
    %v253 = vadd.f32 %v158, %v252
    %v254 = vpop.f32.mrb[0].mxu0
    %255 = vdwg.mxu0
    %v256 = vld [vmem:[%s4] sm:$0x1]
    %v258 = vlaneseq
    %v259 = vshrl.u32 %v258, 7
    %v260 = vsub.s32 0, %v259
    %v261 = vrot.slane %v256, %v260
    %v263 = vadd.f32 %v250, %v261
    %v264 = vadd.f32 %v253, %v261
    %v265 = vmax.f32 %v263, 0.0
    %v266 = vmax.f32 %v264, 0.0
    %v267 = vpack.c.bf16 %v266, %v265
    %v268 = vld [vmem:[#allocation8] sm:$0xff]
    %v269 = vld [vmem:[#allocation8 + $0x8] sm:$0xff]
    %v270 = vld [vmem:[#allocation8 + $0x10] sm:$0xff]
    %v271 = vld [vmem:[#allocation8 + $0x18] sm:$0xff]
    %v272 = vld [vmem:[#allocation8 + $0x20] sm:$0xff]
    %v273 = vld [vmem:[#allocation8 + $0x28] sm:$0xff]
    %v274 = vld [vmem:[#allocation8 + $0x30] sm:$0xff]
    %v275 = vld [vmem:[#allocation8 + $0x38] sm:$0xff]
    %v276 = vld [vmem:[#allocation8 + $0x40] sm:$0xff]
    %v277 = vld [vmem:[#allocation8 + $0x48] sm:$0xff]
    %v278 = vld [vmem:[#allocation8 + $0x50] sm:$0xff]
    %v279 = vld [vmem:[#allocation8 + $0x58] sm:$0xff]
    %v280 = vld [vmem:[#allocation8 + $0x60] sm:$0xff]
    %v281 = vld [vmem:[#allocation8 + $0x68] sm:$0xff]
    %v282 = vld [vmem:[#allocation8 + $0x70] sm:$0xff]
    %v283 = vld [vmem:[#allocation8 + $0x78] sm:$0xff]
    %v284 = vld [vmem:[%s6] sm:$0x3]
    %v286 = vlaneseq
    %v287 = vshrl.u32 %v286, 7
    %v288 = vsub.s32 0, %v287
    %v289 = vrot.slane %v284, %v288
    %v290 = vlaneseq
    %v291 = vshrl.u32 %v290, 7
    %v292 = vsub.s32 1, %v291
    %v293 = vrot.slane %v284, %v292
    %v312 = vunpack.c.l.b16 %v268
    %v313 = vunpack.c.h.b16 %v268
    %v314 = vunpack.c.l.b16 %v269
    %v315 = vunpack.c.h.b16 %v269
    %v316 = vunpack.c.l.b16 %v270
    %v317 = vunpack.c.h.b16 %v270
    %v318 = vunpack.c.l.b16 %v271
    %v319 = vunpack.c.h.b16 %v271
    %v320 = vunpack.c.l.b16 %v272
    %v321 = vunpack.c.h.b16 %v272
    %v322 = vunpack.c.l.b16 %v273
    %v323 = vunpack.c.h.b16 %v273
    %v324 = vunpack.c.l.b16 %v274
    %v325 = vunpack.c.h.b16 %v274
    %v326 = vunpack.c.l.b16 %v275
    %v327 = vunpack.c.h.b16 %v275
    %v328 = vunpack.c.l.b16 %v276
    %v329 = vunpack.c.h.b16 %v276
    %v330 = vunpack.c.l.b16 %v277
    %v331 = vunpack.c.h.b16 %v277
    %v332 = vunpack.c.l.b16 %v278
    %v333 = vunpack.c.h.b16 %v278
    %v334 = vunpack.c.l.b16 %v279
    %v335 = vunpack.c.h.b16 %v279
    %v336 = vunpack.c.l.b16 %v280
    %v337 = vunpack.c.h.b16 %v280
    %v338 = vunpack.c.l.b16 %v281
    %v339 = vunpack.c.h.b16 %v281
    %v340 = vunpack.c.l.b16 %v282
    %v341 = vunpack.c.h.b16 %v282
    %v342 = vunpack.c.l.b16 %v283
    %v343 = vunpack.c.h.b16 %v283
    %v344 = vpack.c.b16 %v314, %v312
    %v345 = vpack.c.b16 %v315, %v313
    %v346 = vpack.c.b16 %v318, %v316
    %v347 = vpack.c.b16 %v319, %v317
    %v348 = vpack.c.b16 %v322, %v320
    %v349 = vpack.c.b16 %v323, %v321
    %v350 = vpack.c.b16 %v326, %v324
    %v351 = vpack.c.b16 %v327, %v325
    %v352 = vpack.c.b16 %v330, %v328
    %v353 = vpack.c.b16 %v331, %v329
    %v354 = vpack.c.b16 %v334, %v332
    %v355 = vpack.c.b16 %v335, %v333
    %v356 = vpack.c.b16 %v338, %v336
    %v357 = vpack.c.b16 %v339, %v337
    %v358 = vpack.c.b16 %v342, %v340
    %v359 = vpack.c.b16 %v343, %v341
    %376 = vmatprep.subr.bf16.mxu0 %v345
    %377 = vmatpush1.bf16.msra.mxu0 %v344
    %378 = vmatprep.subr.bf16.mxu0 %v347
    %379 = vmatpush1.bf16.msra.mxu0 %v346
    %380 = vmatprep.subr.bf16.mxu0 %v349
    %381 = vmatpush1.bf16.msra.mxu0 %v348
    %382 = vmatprep.subr.bf16.mxu0 %v351
    %383 = vmatpush1.bf16.msra.mxu0 %v350
    %384 = vmatprep.subr.bf16.mxu0 %v353
    %385 = vmatpush1.bf16.msra.mxu0 %v352
    %386 = vmatprep.subr.bf16.mxu0 %v355
    %387 = vmatpush1.bf16.msra.mxu0 %v354
    %388 = vmatprep.subr.bf16.mxu0 %v357
    %389 = vmatpush1.bf16.msra.mxu0 %v356
    %390 = vmatprep.subr.bf16.mxu0 %v359
    %391 = vmatpush1.bf16.msra.mxu0 %v358
    %392 = vmatprep.subr.bf16.mxu0 0
    %393 = vmatpush1.bf16.msra.mxu0 0
    %394 = vmatprep.subr.bf16.mxu0 0
    %395 = vmatpush1.bf16.msra.mxu0 0
    %396 = vmatprep.subr.bf16.mxu0 0
    %397 = vmatpush1.bf16.msra.mxu0 0
    %398 = vmatprep.subr.bf16.mxu0 0
    %399 = vmatpush1.bf16.msra.mxu0 0
    %400 = vmatprep.subr.bf16.mxu0 0
    %401 = vmatpush1.bf16.msra.mxu0 0
    %402 = vmatprep.subr.bf16.mxu0 0
    %403 = vmatpush1.bf16.msra.mxu0 0
    %404 = vmatprep.subr.bf16.mxu0 0
    %405 = vmatpush1.bf16.msra.mxu0 0
    %406 = vmatprep.subr.bf16.mxu0 0
    %407 = vmatpush1.bf16.msra.mxu0 0
    %408 = vmatprep.mubr.bf16.mxu0 0
    %409 = vmatmul.mubr.bf16.gmra.mrb[0].mxu0 %v267
    %v410 = vpop.f32.mrb[0].mxu0
    %v411 = vadd.f32 %v289, %v410
    %v412 = vpop.f32.mrb[0].mxu0
    %v413 = vadd.f32 %v293, %v412
    %v414 = vpop.f32.mrb[0].mxu0
    %v415 = vadd.f32 %v289, %v414
    %v416 = vpop.f32.mrb[0].mxu0
    %v417 = vadd.f32 %v293, %v416
    %418 = vdwg.mxu0
    %v419 = vadd.f32 %v413, 1.5
    %v420 = vadd.f32 %v417, 1.5
    %v421 = vxor.u32 %v419, 2147483648
    %v422 = vxor.u32 %v420, 2147483648
    %v423 = vmul.f32 %v421, 1.442695
    %v424 = vpow.pop %v423
    %v425 = vmul.f32 %v422, 1.442695
    %v426 = vpow.pop %v425
    %v427 = vadd.f32 %v424, 1.0
    %v428 = vadd.f32 %v426, 1.0
    %v429 = vrcp.pop %v427
    %v430 = vmul.f32 1.0, %v429
    %v431 = vrcp.pop %v428
    %v432 = vmul.f32 1.0, %v431
    %v433 = vunpack.c.l.bf16 %v83
    %v434 = vunpack.c.l.bf16 %v84
    %v435 = vmul.f32 %v430, %v433
    %v436 = vmul.f32 %v432, %v434
    %v437 = vsub.f32 1.0, %v430
    %v438 = vsub.f32 1.0, %v432
    %v439 = vmul.f32 %v437, %v411
    %v440 = vmul.f32 %v438, %v415
    %v441 = vadd.f32 %v435, %v439
    %v442 = vadd.f32 %v436, %v440
    %v443 = vlaneseq
    %v444 = vand.u32 %v443, 127
    %vm445 = vcmp.lt.s32.totalorder %v444, 8
    %v446 = vadd.f32 %v430, 1e-06
    %v447 = vadd.f32 %v432, 1e-06
    %v448 = vlog2.pop %v446
    %v449 = vmul.f32 %v448, 0.6931472
    %v450 = vlog2.pop %v447
    %v451 = vmul.f32 %v450, 0.6931472
    %v452 = vsel %vm445, %v449, 0.0
    %v453 = vsel %vm445, %v451, 0.0
    %454 = vadd.xlane.f32.xlu0 %v452
    %v455 = vpop.xlane.xlu0 %454
    %456 = vadd.xlane.f32.xlu0 %v453
    %v457 = vpop.xlane.xlu0 %456
    %v458 = vsub.f32 0.0, %v455
    %v459 = vsub.f32 0.0, %v457
    %vm460 = vcmp.eq.s32.totalorder %v444, 8
    %v461 = vsel %vm460, %v458, %v441
    %v462 = vsel %vm460, %v459, %v442
    %463 = vst [vmem:[#allocation10] sm:$0xff] %v461
    %464 = vst [vmem:[#allocation10 + $0x8] sm:$0xff] %v462
    // Predicated region
    $region46: #{tpu_custom_call.1} parent=1 // pred_check
      _
    $region47: #{tpu_custom_call.1} parent=1 // pred_check_branch
      %466 = sbr.rel (0) target = $region49
    $region48: #{tpu_custom_call.1} parent=1 // pred_region
      %s468 = ssub.s32 256, 256
      %469 = vsyncadd [#allocation4], %s468
      %s470 = sshll.u32 [#allocation10], 4
      %s471 = int_to_ptr.vmem [resolvable:$true] %s470
      %476 = dma.vmem_to_hbm [thread:$0]  %s471, 256, %s7, [#allocation4], 128, 128, 8
    $region49: #{tpu_custom_call.1} parent=1 // pred_fallthru
      _
    // Predicated region
    $region50: #{tpu_custom_call.1} parent=1 // pred_check
      _
    $region51: #{tpu_custom_call.1} parent=1 // pred_check_branch
      %478 = sbr.rel (0) target = $region53
    $region52: #{tpu_custom_call.1} parent=1 // pred_region
      %479 = dma.done [#allocation4], 256
    $region53: #{tpu_custom_call.1} parent=1 // pred_fallthru
      _
    %480 = vsyncpa [#allocation3], 1
    %481 = vsyncpa [#allocation6], 1
    %482 = vsyncpa [#allocation9], 1
    %483 = vsyncpa [#allocation4], 1

</llo_original>
